<compile_context>
chip_gen: v6e
topology: v6e:2x2x1
jax: 0.10.0
libtpu: 0.0.40
codegen_flags: <defaults>
</compile_context>

<pallas_src>
import functools

import jax
import jax.numpy as jnp
from jax import lax
from jax.experimental import pallas as pl
from jax.experimental.pallas import tpu as pltpu


def _round_up(x, m):
    return (x + m - 1) // m * m


# --------------------------------------------------------------------------------------
# Stage 1: fused Q|K|V projection (1x1 convs as a single channel matmul)
# --------------------------------------------------------------------------------------
def pam_proj_kernel(x_ref, w_ref, b_ref, q_ref, k_ref, v_ref, *, c8):
    x = x_ref[0]                                                      # (C, TN) f32
    # One (2*C8+C, C) @ (C, TN) matmul per tile: Q, K and V share the MXU pass.
    y = jnp.dot(w_ref[...], x, preferred_element_type=jnp.float32) + b_ref[...]
    # Store intermediates in bf16: halves HBM write + re-read of the whole slab.
    q_ref[0] = y[:c8].astype(q_ref.dtype)                             # (C8, TN)
    k_ref[0] = y[c8:2 * c8].astype(k_ref.dtype)                       # (C8, TN)
    v_ref[0] = y[2 * c8:].astype(v_ref.dtype)                         # (C,  TN)


# --------------------------------------------------------------------------------------
# Stage 2: flash-style position attention + gamma * out + x residual
# --------------------------------------------------------------------------------------
def pam_attn_kernel(q_ref, k_ref, v_ref, x_ref, gamma_ref, out_ref,
                    m_sc, l_sc, acc_sc, *, n_valid, needs_mask):
    ki = pl.program_id(2)

    @pl.when(ki == 0)
    def _init():
        m_sc[...] = jnp.full_like(m_sc, -jnp.inf)
        l_sc[...] = jnp.zeros_like(l_sc)
        acc_sc[...] = jnp.zeros_like(acc_sc)

    q = q_ref[0]                                                      # (C8, TQ) bf16
    k = k_ref[0]                                                      # (C8, TK) bf16

    # s[m, n] = sum_c k[c, m] * q[c, n]  (== energy[n, m]).  bf16 operands feed the
    # MXU at native bf16 rate; accumulation is f32.
    s = lax.dot_general(k, q, (((0,), (0,)), ((), ())),
                        preferred_element_type=jnp.float32)           # (TK, TQ) f32

    if needs_mask:
        # Padded key columns (global key index >= n_valid) must not contribute.
        tk = k.shape[1]
        key_idx = ki * tk + lax.broadcasted_iota(jnp.int32, (tk, 1), 0)
        s = jnp.where(key_idx < n_valid, s, -1e30)

    # Online softmax over the key axis (axis 0 of s), per query column.  f32 stats.
    m_prev = m_sc[...]                                                # (1, TQ)
    m_new = jnp.maximum(m_prev, jnp.max(s, axis=0, keepdims=True))    # (1, TQ)
    alpha = jnp.exp(m_prev - m_new)                                   # (1, TQ)
    p = jnp.exp(s - m_new)                                            # (TK, TQ) f32
    l_sc[...] = alpha * l_sc[...] + jnp.sum(p, axis=0, keepdims=True)
    # acc[c, n] = alpha * acc[c, n] + sum_m v[c, m] * p[m, n]   (stays channel-major)
    # p fed to the PV matmul in bf16 (dominant FLOPs of this kernel), f32 accumulate.
    acc_sc[...] = alpha * acc_sc[...] + jnp.dot(
        v_ref[0], p.astype(jnp.bfloat16), preferred_element_type=jnp.float32)
    m_sc[...] = m_new

    @pl.when(ki == pl.num_programs(2) - 1)
    def _finalize():
        gamma = gamma_ref[0, 0]                                       # SMEM scalar
        inv_l = pl.reciprocal(l_sc[...], approx=False)                # exact, runs once
        out = acc_sc[...] * inv_l                                     # (C, TQ)
        out_ref[0] = (gamma * out + x_ref[0]).astype(out_ref.dtype)


# --------------------------------------------------------------------------------------
# Wrapper
# --------------------------------------------------------------------------------------
def pam_forward(x, wq, bq, wk, bk, wv, bv, gamma, *,
                q_tile=None, kv_tile=None, n_tile=None):
    """x: (B, C, H, W) float32.  Returns (B, C, H, W).  Matches PAM_Module.forward."""
    B, C, H, W = x.shape
    N = H * W
    C8 = wq.shape[0]
    x_flat = x.reshape(B, C, N)

    def default_tile(target=1024):
        # Large tiles amortize per-grid-step overhead and cut K/V re-read traffic;
        # capped so small N stays a single 128-aligned tile.
        return min(target, _round_up(N, 128))

    TQ = q_tile or default_tile()
    TK = kv_tile or default_tile()
    TN = n_tile or default_tile()
    N_pad = max(_round_up(N, t) for t in (TQ, TK, TN))
    assert all(t % 128 == 0 and N_pad % t == 0 for t in (TQ, TK, TN)), \
        "tiles must be multiples of 128 that divide the padded spatial extent"

    if N_pad != N:
        # Zero-pad the spatial axis; padded key columns are masked inside stage 2.
        x_flat = jnp.pad(x_flat, ((0, 0), (0, 0), (0, N_pad - N)))

    # ---------------- Stage 1: fused projections ----------------
    w_all = jnp.concatenate([wq, wk, wv], axis=0)        # (2*C8+C, C)
    b_all = jnp.concatenate([bq, bk, bv], axis=0)        # (2*C8+C, 1)

    proj_flops = 2 * B * N_pad * C * (2 * C8 + C)
    proj_bytes = (4 * B * C * N_pad                       # x in (f32)
                  + 2 * B * (2 * C8 + C) * N_pad          # q/k/v out (bf16)
                  + 4 * (2 * C8 + C) * (C + 1))           # weights + bias

    q_bf, k_bf, v_bf = pl.pallas_call(
        functools.partial(pam_proj_kernel, c8=C8),
        out_shape=(jax.ShapeDtypeStruct((B, C8, N_pad), jnp.bfloat16),
                   jax.ShapeDtypeStruct((B, C8, N_pad), jnp.bfloat16),
                   jax.ShapeDtypeStruct((B, C, N_pad), jnp.bfloat16)),
        grid_spec=pltpu.PrefetchScalarGridSpec(
            num_scalar_prefetch=0,
            grid=(B, N_pad // TN),
            in_specs=[
                pl.BlockSpec((1, C, TN), lambda b, n: (b, 0, n)),        # x
                pl.BlockSpec((2 * C8 + C, C), lambda b, n: (0, 0)),      # Wq|Wk|Wv
                pl.BlockSpec((2 * C8 + C, 1), lambda b, n: (0, 0)),      # bq|bk|bv
            ],
            out_specs=[
                pl.BlockSpec((1, C8, TN), lambda b, n: (b, 0, n)),       # q (bf16)
                pl.BlockSpec((1, C8, TN), lambda b, n: (b, 0, n)),       # k (bf16)
                pl.BlockSpec((1, C, TN), lambda b, n: (b, 0, n)),        # v (bf16)
            ],
        ),
        compiler_params=pltpu.CompilerParams(
            dimension_semantics=("parallel", "parallel"),
            vmem_limit_bytes=48 * 1024 * 1024),
        cost_estimate=pl.CostEstimate(flops=proj_flops, transcendentals=0,
                                      bytes_accessed=proj_bytes),
    )(x_flat, w_all, b_all)

    # ---------------- Stage 2: flash-style attention + residual ----------------
    attn_flops = 2 * B * N_pad * N_pad * (C8 + C)
    attn_bytes = (2 * B * C8 * N_pad                               # q (bf16)
                  + (N_pad // TQ) * 2 * B * (C8 + C) * N_pad       # k + v re-reads (bf16)
                  + 2 * 4 * B * C * N_pad)                         # x in + out (f32)

    out_flat = pl.pallas_call(
        functools.partial(pam_attn_kernel, n_valid=N, needs_mask=(N_pad != N)),
        out_shape=jax.ShapeDtypeStruct((B, C, N_pad), x.dtype),
        grid_spec=pltpu.PrefetchScalarGridSpec(
            num_scalar_prefetch=0,
            grid=(B, N_pad // TQ, N_pad // TK),
            in_specs=[
                pl.BlockSpec((1, C8, TQ), lambda b, qi, ki: (b, 0, qi)),   # q
                pl.BlockSpec((1, C8, TK), lambda b, qi, ki: (b, 0, ki)),   # k
                pl.BlockSpec((1, C, TK), lambda b, qi, ki: (b, 0, ki)),    # v
                pl.BlockSpec((1, C, TQ), lambda b, qi, ki: (b, 0, qi)),    # x (residual)
                pl.BlockSpec(memory_space=pltpu.MemorySpace.SMEM),          # gamma scalar
            ],
            out_specs=pl.BlockSpec((1, C, TQ), lambda b, qi, ki: (b, 0, qi)),
            scratch_shapes=[
                pltpu.VMEM((1, TQ), jnp.float32),   # running max
                pltpu.VMEM((1, TQ), jnp.float32),   # running denom
                pltpu.VMEM((C, TQ), jnp.float32),   # output accumulator
            ],
        ),
        compiler_params=pltpu.CompilerParams(
            dimension_semantics=("parallel", "parallel", "arbitrary"),
            vmem_limit_bytes=48 * 1024 * 1024),
        cost_estimate=pl.CostEstimate(flops=attn_flops, transcendentals=B * N_pad * N_pad,
                                      bytes_accessed=attn_bytes),
    )(q_bf, k_bf, v_bf, x_flat, gamma)

    if N_pad != N:
        out_flat = out_flat[:, :, :N]
    return out_flat.reshape(B, C, H, W)


# --------------------------------------------------------------------------------------
# Pure-JAX reference mirroring the PyTorch forward exactly
# --------------------------------------------------------------------------------------
def pam_reference(x, wq, bq, wk, bk, wv, bv, gamma):
    B, C, H, W = x.shape
    N = H * W
    xf = x.reshape(B, C, N)
    q = jnp.einsum('oc,bcn->bon', wq, xf) + bq[None, :, :]   # (B, C8, N)
    k = jnp.einsum('oc,bcn->bon', wk, xf) + bk[None, :, :]
    v = jnp.einsum('oc,bcn->bon', wv, xf) + bv[None, :, :]   # (B, C, N)
    energy = jnp.einsum('bcn,bcm->bnm', q, k)                # (B, N, N)
    attn = jax.nn.softmax(energy, axis=-1)
    out = jnp.einsum('bcn,bmn->bcm', v, attn)                # (B, C, N)
    out = out.reshape(B, C, H, W)
    return gamma[0, 0] * out + x


def _make_params(key, C):
    C8 = C // 8
    kq, kbq, kk, kbk, kv, kbv = jax.random.split(key, 6)
    wq = 0.1 * jax.random.normal(kq, (C8, C), dtype=jnp.float32)
    bq = 0.1 * jax.random.normal(kbq, (C8, 1), dtype=jnp.float32)
    wk = 0.1 * jax.random.normal(kk, (C8, C), dtype=jnp.float32)
    bk = 0.1 * jax.random.normal(kbk, (C8, 1), dtype=jnp.float32)
    wv = 0.1 * jax.random.normal(kv, (C, C), dtype=jnp.float32)
    bv = 0.1 * jax.random.normal(kbv, (C, 1), dtype=jnp.float32)
    return wq, bq, wk, bk, wv, bv


if __name__ == "__main__":
    key = jax.random.PRNGKey(0)
    kx1, kx2, kp = jax.random.split(key, 3)

    # PyTorch inits gamma to 0; use a nonzero deterministic value so the attention
    # path actually contributes to the output under test.
    gamma = jnp.full((1, 1), 0.5, dtype=jnp.float32)

    # Tolerance accounts for the bf16 q/k/v intermediates and bf16 softmax weights
    # fed to the MXU (accumulation and running softmax statistics stay f32).
    ATOL = RTOL = 2e-2

    # --- Test 1: H = W = 16 -> N = 256 with 128-wide q/kv tiles: exercises the
    #     multi-tile online-softmax path (2 query tiles x 2 key/value steps).
    B, C, H, W = 2, 16, 16, 16
    x = jax.random.normal(kx1, (B, C, H, W), dtype=jnp.float32)
    params = _make_params(kp, C)
    out = pam_forward(x, *params, gamma, q_tile=128, kv_tile=128)
    out = jax.block_until_ready(out)
    ref = pam_reference(x, *params, gamma)
    assert out.shape == (B, C, H, W)
    assert jnp.allclose(out, ref, atol=ATOL, rtol=RTOL), "mismatch vs JAX reference (test 1)"

    # --- Test 2: H = W = 10 -> N = 100 (not a multiple of 128): exercises the
    #     pad-to-128 + key-masking path.
    B2, H2, W2 = 1, 10, 10
    x2 = jax.random.normal(kx2, (B2, C, H2, W2), dtype=jnp.float32)
    out2 = pam_forward(x2, *params, gamma)
    out2 = jax.block_until_ready(out2)
    ref2 = pam_reference(x2, *params, gamma)
    assert out2.shape == (B2, C, H2, W2)
    assert jnp.allclose(out2, ref2, atol=ATOL, rtol=RTOL), "mismatch vs JAX reference (test 2)"

    print("KERNEL_OK")
</pallas_src>

<mosaic_0001>
module attributes {stable_mosaic.version = 11 : i64} {
  func.func @pam_proj_kernel(%arg0: i32, %arg1: i32, %arg2: memref<1x16x256xf32, #tpu.memory_space<vmem>>, %arg3: memref<20x16xf32, #tpu.memory_space<vmem>>, %arg4: memref<20x1xf32, #tpu.memory_space<vmem>>, %arg5: memref<1x2x256xbf16, #tpu.memory_space<vmem>>, %arg6: memref<1x2x256xbf16, #tpu.memory_space<vmem>>, %arg7: memref<1x16x256xbf16, #tpu.memory_space<vmem>>) attributes {dimension_semantics = [#tpu.dimension_semantics<parallel>, #tpu.dimension_semantics<parallel>], iteration_bounds = array<i64: 2, 1>, scalar_prefetch = 0 : i64, scratch_operands = 0 : i64, tpu.core_type = #tpu.core_type<tc>, window_params = [{transform_indices = @transform_0, window_bounds = array<i64: 1, 16, 256>}, {pipeline_mode = #tpu.pipeline_mode<synchronous>, transform_indices = @transform_1, window_bounds = array<i64: 20, 16>}, {pipeline_mode = #tpu.pipeline_mode<synchronous>, transform_indices = @transform_2, window_bounds = array<i64: 20, 1>}, {transform_indices = @transform_3, window_bounds = array<i64: 1, 2, 256>}, {transform_indices = @transform_4, window_bounds = array<i64: 1, 2, 256>}, {transform_indices = @transform_5, window_bounds = array<i64: 1, 16, 256>}]} {
    %c0 = arith.constant 0 : index
    %c0_0 = arith.constant 0 : index
    %c0_1 = arith.constant 0 : index
    %0 = vector.load %arg2[%c0, %c0_0, %c0_1] : memref<1x16x256xf32, #tpu.memory_space<vmem>>, vector<1x16x256xf32>
    %1 = vector.shape_cast %0 : vector<1x16x256xf32> to vector<16x256xf32>
    %c0_2 = arith.constant 0 : index
    %c0_3 = arith.constant 0 : index
    %2 = vector.load %arg3[%c0_2, %c0_3] : memref<20x16xf32, #tpu.memory_space<vmem>>, vector<20x16xf32>
    %cst = arith.constant dense<0.000000e+00> : vector<20x256xf32>
    %3 = tpu.matmul %2, %1, %cst {dimension_numbers = #tpu.dot_dimension_numbers<[1], [0], [0], [1], [0, 0, 1, 1], [], []>} : vector<20x16xf32>, vector<16x256xf32>, vector<20x256xf32> -> vector<20x256xf32>
    %c0_4 = arith.constant 0 : index
    %c0_5 = arith.constant 0 : index
    %4 = vector.load %arg4[%c0_4, %c0_5] : memref<20x1xf32, #tpu.memory_space<vmem>>, vector<20x1xf32>
    %5 = vector.broadcast %4 : vector<20x1xf32> to vector<20x256xf32>
    %6 = arith.addf %3, %5 : vector<20x256xf32>
    %7 = vector.extract_strided_slice %6 {offsets = [0, 0], sizes = [2, 256], strides = [1, 1]} : vector<20x256xf32> to vector<2x256xf32>
    %8 = arith.truncf %7 : vector<2x256xf32> to vector<2x256xbf16>
    %c0_6 = arith.constant 0 : index
    %c0_7 = arith.constant 0 : index
    %c0_8 = arith.constant 0 : index
    %9 = vector.load %arg5[%c0_6, %c0_7, %c0_8] : memref<1x2x256xbf16, #tpu.memory_space<vmem>>, vector<1x2x256xbf16>
    %10 = vector.shape_cast %9 : vector<1x2x256xbf16> to vector<2x256xbf16>
    %11 = vector.shape_cast %8 : vector<2x256xbf16> to vector<1x2x256xbf16>
    tpu.vector_store %arg5[%c0_6, %c0_7, %c0_8], %11 {strides = array<i32>} : memref<1x2x256xbf16, #tpu.memory_space<vmem>>, vector<1x2x256xbf16>,
    %12 = vector.extract_strided_slice %6 {offsets = [2, 0], sizes = [2, 256], strides = [1, 1]} : vector<20x256xf32> to vector<2x256xf32>
    %13 = arith.truncf %12 : vector<2x256xf32> to vector<2x256xbf16>
    %c0_9 = arith.constant 0 : index
    %c0_10 = arith.constant 0 : index
    %c0_11 = arith.constant 0 : index
    %14 = vector.load %arg6[%c0_9, %c0_10, %c0_11] : memref<1x2x256xbf16, #tpu.memory_space<vmem>>, vector<1x2x256xbf16>
    %15 = vector.shape_cast %14 : vector<1x2x256xbf16> to vector<2x256xbf16>
    %16 = vector.shape_cast %13 : vector<2x256xbf16> to vector<1x2x256xbf16>
    tpu.vector_store %arg6[%c0_9, %c0_10, %c0_11], %16 {strides = array<i32>} : memref<1x2x256xbf16, #tpu.memory_space<vmem>>, vector<1x2x256xbf16>,
    %17 = vector.extract_strided_slice %6 {offsets = [4, 0], sizes = [16, 256], strides = [1, 1]} : vector<20x256xf32> to vector<16x256xf32>
    %18 = arith.truncf %17 : vector<16x256xf32> to vector<16x256xbf16>
    %c0_12 = arith.constant 0 : index
    %c0_13 = arith.constant 0 : index
    %c0_14 = arith.constant 0 : index
    %19 = vector.load %arg7[%c0_12, %c0_13, %c0_14] : memref<1x16x256xbf16, #tpu.memory_space<vmem>>, vector<1x16x256xbf16>
    %20 = vector.shape_cast %19 : vector<1x16x256xbf16> to vector<16x256xbf16>
    %21 = vector.shape_cast %18 : vector<16x256xbf16> to vector<1x16x256xbf16>
    tpu.vector_store %arg7[%c0_12, %c0_13, %c0_14], %21 {strides = array<i32>} : memref<1x16x256xbf16, #tpu.memory_space<vmem>>, vector<1x16x256xbf16>,
    return
  }
  func.func @transform_0(%arg0: i32, %arg1: i32) -> (i32, i32, i32) {
    %c0_i32 = arith.constant 0 : i32
    %c0_i32_0 = arith.constant 0 : i32
    return %arg0, %c0_i32, %arg1 : i32, i32, i32
  }
  func.func @transform_1(%arg0: i32, %arg1: i32) -> (i32, i32) {
    %c0_i32 = arith.constant 0 : i32
    %c0_i32_0 = arith.constant 0 : i32
    %c0_i32_1 = arith.constant 0 : i32
    return %c0_i32, %c0_i32_0 : i32, i32
  }
  func.func @transform_2(%arg0: i32, %arg1: i32) -> (i32, i32) {
    %c0_i32 = arith.constant 0 : i32
    %c0_i32_0 = arith.constant 0 : i32
    %c0_i32_1 = arith.constant 0 : i32
    return %c0_i32, %c0_i32_0 : i32, i32
  }
  func.func @transform_3(%arg0: i32, %arg1: i32) -> (i32, i32, i32) {
    %c0_i32 = arith.constant 0 : i32
    %c0_i32_0 = arith.constant 0 : i32
    return %arg0, %c0_i32, %arg1 : i32, i32, i32
  }
  func.func @transform_4(%arg0: i32, %arg1: i32) -> (i32, i32, i32) {
    %c0_i32 = arith.constant 0 : i32
    %c0_i32_0 = arith.constant 0 : i32
    return %arg0, %c0_i32, %arg1 : i32, i32, i32
  }
  func.func @transform_5(%arg0: i32, %arg1: i32) -> (i32, i32, i32) {
    %c0_i32 = arith.constant 0 : i32
    %c0_i32_0 = arith.constant 0 : i32
    return %arg0, %c0_i32, %arg1 : i32, i32, i32
  }
}

</mosaic_0001>

<llo_original>
// kernel: tpu_custom_call.1
$region0: #{tpu_custom_call.1}
  #allocation0 [shape = 'u32[]', space=smem, size = 0x4, offset = 0x4, fixed_abs, tag = 'smem constant byte address 0x4 - core index']
  #allocation1 [shape = 'u32[144,128]{1,0:T(1,128)}', space=vmem, size = 0x12000, scoped, tag = 'internal scratch']
  %s0 = inlined_call_operand.vmem [shape: f32[2,16,256], index: 0, kind: input, shape index: {}]
  %s1 = inlined_call_operand.vmem [shape: f32[20,16], index: 1, kind: input, shape index: {}]
  %s2 = inlined_call_operand.vmem [shape: f32[20,1], index: 2, kind: input, shape index: {}]
  %s3 = inlined_call_operand.hbm [shape: bf16[2,2,256], index: 3, kind: output, shape index: {0}]
  %s4 = inlined_call_operand.hbm [shape: bf16[2,2,256], index: 4, kind: output, shape index: {1}]
  %s5 = inlined_call_operand.hbm [shape: bf16[2,16,256], index: 5, kind: output, shape index: {2}]
  %6 = xla_tuple %s3, %s4, %s5
  %s7 = sld [smem:[#allocation0]]
  $region61: #{tpu_custom_call.1} parent=0
    _
  %s9 = ssub.s32 1, %s7
  %s10 = scalar_select 0, %s9, %s7
  $region1: #{tpu_custom_call.1} parent=0
    #allocation2 [shape = 'u8[2048]{0}', space=vmem, size = 0x800, scoped, tag = 'output window, operand 0']
    #allocation3 [shape = 's32[2]{0}', space=sflag, size = 0x8, scoped, tag = 'scoped memory for tpu_custom_call.1']
    #allocation4 [shape = 'u8[2048]{0}', space=vmem, size = 0x800, scoped, tag = 'output window, operand 1']
    #allocation5 [shape = 's32[2]{0}', space=sflag, size = 0x8, scoped, tag = 'scoped memory for tpu_custom_call.1']
    #allocation6 [shape = 'u8[16384]{0}', space=vmem, size = 0x4000, scoped, tag = 'output window, operand 2']
    %11 = vsyncpa [#allocation3], 0
    %s12 = scalar_lea.sflag [#allocation3], 1
    %13 = vsyncpa %s12, 0
    %14 = vsyncpa [#allocation5], 0
    %s15 = scalar_lea.sflag [#allocation5], 1
    %16 = vsyncpa %s15, 0
    loop: start=0, step=1, limit=4
    $region2: #{tpu_custom_call.1} parent=1 // loop_pre_header
      _
    $region3: #{tpu_custom_call.1} parent=1 // loop_header
      %s18 = sphi 0, %s22
      %p19 = scmp.ge.s32.totalorder %s18, 4
      %s25 = sphi 0, %s37
      %s26 = sphi 0, %s33
      %s27 = sphi 0, %s25
      %s28 = sphi 0, %s26
      %s29 = sphi 0, %s27
      %s30 = sphi 0, %s28
      %s42 = sphi 0, %s44
      %s45 = sphi 0, %s42
      %s46 = sphi 0, %s45
      %s62 = sphi 0, %s46
      %s66 = sphi 0, %s66
      %s68 = sphi 0, %s66
      %s69 = sphi 0, %s68
      %s83 = sphi 0, %s69
      %s87 = sphi 0, %s87
      %s89 = sphi 0, %s87
      %s90 = sphi 0, %s89
      %s104 = sphi 0, %s90
      %s112 = sphi 0, %s114
      %s115 = sphi 0, %s112
      %s116 = sphi 0, %s115
      %s132 = sphi 0, %s116
      %s140 = sphi 0, %s142
      %s143 = sphi 0, %s140
      %s144 = sphi 0, %s143
      %s160 = sphi 0, %s144
      %s168 = sphi 0, %s170
      %s171 = sphi 0, %s168
      %s172 = sphi 0, %s171
      %s188 = sphi 0, %s172
    $region4: #{tpu_custom_call.1} parent=1 // loop_header_branch
      %21 = sbr.rel (%p19) target = $region8
    $region5: #{tpu_custom_call.1} parent=1 // loop_body
      %s23 = ssub.s32 %s18, 1
      %s24 = ssub.s32 %s18, 2
      %s31 = sadd.s32 1, %s26
      %p32 = scmp.ge.s32.totalorder %s31, 1
      %s33 = scalar_select %p32, 0, %s31
      %s34 = sadd.s32 1, %s25
      %s35 = scalar_select %p32, %s34, %s25
      %p36 = scmp.ge.s32.totalorder %s35, 2
      %s37 = scalar_select %p36, 0, %s35
      %s38 = ssub.s32 %s25, %s37
      %s39 = ssub.s32 %s26, %s33
      %s40 = sor.u32 %s38, %s39
      %p41 = scmp.eq.s32.totalorder %s40, 0
      %s43 = sadd.s32 %s42, 1
      %s44 = scalar_select %p41, %s42, %s43
      %p47 = pneg %p41
      %p48 = scmp.eq.s32.totalorder %s18, 1
      %p49 = por %p47, %p48
      %p50 = scmp.ne.s32.totalorder %s42, %s45
      %p51 = scmp.eq.s32.totalorder %s18, 0
      %p52 = por %p50, %p51
      %p53 = scmp.ne.s32.totalorder %s42, %s45
      %p54 = scmp.eq.s32.totalorder %s23, 1
      %p55 = por %p53, %p54
      %p56 = scmp.ne.s32.totalorder %s45, %s46
      %p57 = scmp.eq.s32.totalorder %s23, 0
      %p58 = por %p56, %p57
      %p59 = scmp.ne.s32.totalorder %s45, %s46
      %p60 = scmp.eq.s32.totalorder %s24, 1
      %p61 = por %p59, %p60
      %p63 = scmp.ne.s32.totalorder %s46, %s62
      %p64 = scmp.eq.s32.totalorder %s24, 0
      %p65 = por %p63, %p64
      %s67 = sadd.s32 %s66, 1
      %p70 = scmp.eq.s32.totalorder %s18, 1
      %p71 = scmp.ne.s32.totalorder %s66, %s68
      %p72 = scmp.eq.s32.totalorder %s18, 0
      %p73 = por %p71, %p72
      %p74 = scmp.ne.s32.totalorder %s66, %s68
      %p75 = scmp.eq.s32.totalorder %s23, 1
      %p76 = por %p74, %p75
      %p77 = scmp.ne.s32.totalorder %s68, %s69
      %p78 = scmp.eq.s32.totalorder %s23, 0
      %p79 = por %p77, %p78
      %p80 = scmp.ne.s32.totalorder %s68, %s69
      %p81 = scmp.eq.s32.totalorder %s24, 1
      %p82 = por %p80, %p81
      %p84 = scmp.ne.s32.totalorder %s69, %s83
      %p85 = scmp.eq.s32.totalorder %s24, 0
      %p86 = por %p84, %p85
      %s88 = sadd.s32 %s87, 1
      %p91 = scmp.eq.s32.totalorder %s18, 1
      %p92 = scmp.ne.s32.totalorder %s87, %s89
      %p93 = scmp.eq.s32.totalorder %s18, 0
      %p94 = por %p92, %p93
      %p95 = scmp.ne.s32.totalorder %s87, %s89
      %p96 = scmp.eq.s32.totalorder %s23, 1
      %p97 = por %p95, %p96
      %p98 = scmp.ne.s32.totalorder %s89, %s90
      %p99 = scmp.eq.s32.totalorder %s23, 0
      %p100 = por %p98, %p99
      %p101 = scmp.ne.s32.totalorder %s89, %s90
      %p102 = scmp.eq.s32.totalorder %s24, 1
      %p103 = por %p101, %p102
      %p105 = scmp.ne.s32.totalorder %s90, %s104
      %p106 = scmp.eq.s32.totalorder %s24, 0
      %p107 = por %p105, %p106
      %s108 = ssub.s32 %s25, %s37
      %s109 = ssub.s32 %s26, %s33
      %s110 = sor.u32 %s108, %s109
      %p111 = scmp.eq.s32.totalorder %s110, 0
      %s113 = sadd.s32 %s112, 1
      %s114 = scalar_select %p111, %s112, %s113
      %p117 = pneg %p111
      %p118 = scmp.eq.s32.totalorder %s18, 1
      %p119 = por %p117, %p118
      %p120 = scmp.ne.s32.totalorder %s112, %s115
      %p121 = scmp.eq.s32.totalorder %s18, 0
      %p122 = por %p120, %p121
      %p123 = scmp.ne.s32.totalorder %s112, %s115
      %p124 = scmp.eq.s32.totalorder %s23, 1
      %p125 = por %p123, %p124
      %p126 = scmp.ne.s32.totalorder %s115, %s116
      %p127 = scmp.eq.s32.totalorder %s23, 0
      %p128 = por %p126, %p127
      %p129 = scmp.ne.s32.totalorder %s115, %s116
      %p130 = scmp.eq.s32.totalorder %s24, 1
      %p131 = por %p129, %p130
      %p133 = scmp.ne.s32.totalorder %s116, %s132
      %p134 = scmp.eq.s32.totalorder %s24, 0
      %p135 = por %p133, %p134
      %s136 = ssub.s32 %s25, %s37
      %s137 = ssub.s32 %s26, %s33
      %s138 = sor.u32 %s136, %s137
      %p139 = scmp.eq.s32.totalorder %s138, 0
      %s141 = sadd.s32 %s140, 1
      %s142 = scalar_select %p139, %s140, %s141
      %p145 = pneg %p139
      %p146 = scmp.eq.s32.totalorder %s18, 1
      %p147 = por %p145, %p146
      %p148 = scmp.ne.s32.totalorder %s140, %s143
      %p149 = scmp.eq.s32.totalorder %s18, 0
      %p150 = por %p148, %p149
      %p151 = scmp.ne.s32.totalorder %s140, %s143
      %p152 = scmp.eq.s32.totalorder %s23, 1
      %p153 = por %p151, %p152
      %p154 = scmp.ne.s32.totalorder %s143, %s144
      %p155 = scmp.eq.s32.totalorder %s23, 0
      %p156 = por %p154, %p155
      %p157 = scmp.ne.s32.totalorder %s143, %s144
      %p158 = scmp.eq.s32.totalorder %s24, 1
      %p159 = por %p157, %p158
      %p161 = scmp.ne.s32.totalorder %s144, %s160
      %p162 = scmp.eq.s32.totalorder %s24, 0
      %p163 = por %p161, %p162
      %s164 = ssub.s32 %s25, %s37
      %s165 = ssub.s32 %s26, %s33
      %s166 = sor.u32 %s164, %s165
      %p167 = scmp.eq.s32.totalorder %s166, 0
      %s169 = sadd.s32 %s168, 1
      %s170 = scalar_select %p167, %s168, %s169
      %p173 = pneg %p167
      %p174 = scmp.eq.s32.totalorder %s18, 1
      %p175 = por %p173, %p174
      %p176 = scmp.ne.s32.totalorder %s168, %s171
      %p177 = scmp.eq.s32.totalorder %s18, 0
      %p178 = por %p176, %p177
      %p179 = scmp.ne.s32.totalorder %s168, %s171
      %p180 = scmp.eq.s32.totalorder %s23, 1
      %p181 = por %p179, %p180
      %p182 = scmp.ne.s32.totalorder %s171, %s172
      %p183 = scmp.eq.s32.totalorder %s23, 0
      %p184 = por %p182, %p183
      %p185 = scmp.ne.s32.totalorder %s171, %s172
      %p186 = scmp.eq.s32.totalorder %s24, 1
      %p187 = por %p185, %p186
      %p189 = scmp.ne.s32.totalorder %s172, %s188
      %p190 = scmp.eq.s32.totalorder %s24, 0
      %p191 = por %p189, %p190
      %p192 = scmp.le.s32.totalorder 1, %s18
      %p193 = scmp.lt.s32.totalorder %s18, 3
      %p194 = pnand %p192, %p193
      %p195 = pneg %p194
      // Predicated region
      $region9: #{tpu_custom_call.1} parent=5 // pred_check
        _
      $region10: #{tpu_custom_call.1} parent=5 // pred_check_branch
        %197 = sbr.rel (%p194) target = $region12
      $region11: #{tpu_custom_call.1} parent=5 // pred_region
        %s198 = ssub.s32 %s18, 1
        // Predicated region
        $region13: #{tpu_custom_call.1} parent=11 // pred_check
          %p199 = pneg %p79
        $region14: #{tpu_custom_call.1} parent=11 // pred_check_branch
          %201 = sbr.rel (%p199) target = $region16
        $region15: #{tpu_custom_call.1} parent=11 // pred_region
          _
        $region16: #{tpu_custom_call.1} parent=11 // pred_fallthru
          _
        // Predicated region
        $region17: #{tpu_custom_call.1} parent=11 // pred_check
          %p202 = pneg %p100
        $region18: #{tpu_custom_call.1} parent=11 // pred_check_branch
          %204 = sbr.rel (%p202) target = $region20
        $region19: #{tpu_custom_call.1} parent=11 // pred_region
          _
        $region20: #{tpu_custom_call.1} parent=11 // pred_fallthru
          _
      $region12: #{tpu_custom_call.1} parent=5 // pred_fallthru
        _
      %p205 = scmp.lt.s32.totalorder %s18, 2
      // Predicated region
      $region21: #{tpu_custom_call.1} parent=5 // pred_check
        %p206 = pneg %p205
      $region22: #{tpu_custom_call.1} parent=5 // pred_check_branch
        %208 = sbr.rel (%p206) target = $region24
      $region23: #{tpu_custom_call.1} parent=5 // pred_region
        // Predicated region
        $region25: #{tpu_custom_call.1} parent=23 // pred_check
          %p209 = pneg %p52
        $region26: #{tpu_custom_call.1} parent=23 // pred_check_branch
          %211 = sbr.rel (%p209) target = $region28
        $region27: #{tpu_custom_call.1} parent=23 // pred_region
          %s212 = smul.u32 2, %s26
          %p213 = scmp.lt.s32.totalorder %s25, 1
          %s214 = scalar_select %p213, %s25, 1
          %p215 = scmp.lt.s32.totalorder %s212, 1
          %s216 = scalar_select %p215, %s212, 1
          %s217 = smul.addr %s214, 4
          %s218 = sadd.s32 %s216, %s217
          %s219 = smul.addr %s218, 8
          %s220 = scalar_lea.vmem %s0, %s219
          %s221 = smul.u32 2, %s26
        $region28: #{tpu_custom_call.1} parent=23 // pred_fallthru
          _
      $region24: #{tpu_custom_call.1} parent=5 // pred_fallthru
        _
      %p222 = scmp.le.s32.totalorder 1, %s18
      %p223 = scmp.lt.s32.totalorder %s18, 3
      %p224 = pnand %p222, %p223
      %p225 = pneg %p224
      // Predicated region
      $region29: #{tpu_custom_call.1} parent=5 // pred_check
        _
      $region30: #{tpu_custom_call.1} parent=5 // pred_check_branch
        %227 = sbr.rel (%p224) target = $region32
      $region31: #{tpu_custom_call.1} parent=5 // pred_region
        %s228 = ssub.s32 %s18, 1
        %s229 = smul.u32 2, %s28
        %p230 = scmp.lt.s32.totalorder %s27, 1
        %s231 = scalar_select %p230, %s27, 1
        %p232 = scmp.lt.s32.totalorder %s229, 1
        %s233 = scalar_select %p232, %s229, 1
        %s234 = smul.addr %s231, 4
        %s235 = sadd.s32 %s233, %s234
        %s236 = smul.addr %s235, 8
        %s237 = scalar_lea.vmem %s0, %s236
        %p238 = pneg %p58
        %p239 = pneg %p55
        %p240 = pneg %p79
        %p241 = pneg %p76
        %p242 = pneg %p100
        %p243 = pneg %p97
        %p244 = pneg %p128
        %p245 = pneg %p125
        %s246 = sand.u32 %s115, 1
        %s247 = scalar_lea.sflag [#allocation3], %s246
        %s248 = sand.u32 %s115, 1
        %s249 = smul.addr %s248, 2
        %s250 = scalar_lea.vmem [#allocation2], %s249
        %p251 = pneg %p156
        %p252 = pneg %p153
        %s253 = sand.u32 %s23, 1
        %s254 = scalar_lea.sflag [#allocation5], %s253
        %s255 = sand.u32 %s143, 1
        %s256 = smul.addr %s255, 2
        %s257 = scalar_lea.vmem [#allocation4], %s256
        %p258 = pneg %p184
        %p259 = pneg %p181
        %s260 = sand.u32 %s23, 1
        %s261 = scalar_lea.sflag [#allocation5], %s260
        %s262 = sand.u32 %s171, 1
        %s263 = smul.addr %s262, 16
        %s264 = scalar_lea.vmem [#allocation6], %s263
        %s265 = smul.u32 2, %s28
        %p266 = scmp.lt.s32.totalorder %s27, 1
        %s267 = scalar_select %p266, %s27, 1
        %p268 = scmp.lt.s32.totalorder %s265, 1
        %s269 = scalar_select %p268, %s265, 1
        %s270 = smul.addr %s267, 4
        %s271 = sadd.s32 %s269, %s270
        %s272 = smul.addr %s271, 8
        %s273 = scalar_lea.vmem %s0, %s272
        %s274 = smul.u32 2, %s28
        %s275 = smul.u32 2, %s28
        %s276 = smul.u32 2, %s28
        %s277 = smul.u32 2, %s28
        %v278 = vld [vmem:[%s273] sm:$0xff]
        %v279 = vld [vmem:[%s273 + $0x8] sm:$0xff]
        %v280 = vld [vmem:[%s273 + $0x10] sm:$0xff]
        %v281 = vld [vmem:[%s273 + $0x18] sm:$0xff]
        %v282 = vld [vmem:[%s1] sm:$0xff]
        %v283 = vld [vmem:[%s1 + $0x8] sm:$0xff]
        %v284 = vld [vmem:[%s1 + $0x10] sm:$0xf]
        %v285 = vld [vmem:[%s2] sm:$0xff]
        %v286 = vld [vmem:[%s2 + $0x8] sm:$0xff]
        %v287 = vld [vmem:[%s2 + $0x10] sm:$0xf]
        %289 = vset.pattern.permute.xlu0 0
        %290 = vperm.xlu0 %289, %v285
        %v291 = vpop.permute.xlu0 %290
        %294 = vset.pattern.permute.xlu0 0
        %295 = vperm.xlu0 %294, %v286
        %v296 = vpop.permute.xlu0 %295
        %299 = vset.pattern.permute.xlu0 0
        %300 = vperm.xlu0 %299, %v287
        %v301 = vpop.permute.xlu0 %300
        %vm303 = vcmask 130048
        %v305 = vsel %vm303, %v282, 0
        %v308 = vsel %vm303, %v283, 0
        %v311 = vsel %vm303, %v284, 0
        %313 = vmatprep.subr.mxu0 0.0
        %314 = vmatpush1.msra.mxu0 0.0
        %315 = vmatprep.subr.mxu0 0.0
        %316 = vmatpush1.msra.mxu0 0.0
        %317 = vmatprep.subr.mxu0 0.0
        %318 = vmatpush1.msra.mxu0 0.0
        %319 = vmatprep.subr.mxu0 0.0
        %320 = vmatpush1.msra.mxu0 0.0
        %321 = vmatprep.subr.mxu0 0.0
        %322 = vmatpush1.msra.mxu0 0.0
        %323 = vmatprep.subr.mxu0 0.0
        %324 = vmatpush1.msra.mxu0 0.0
        %325 = vmatprep.subr.mxu0 0.0
        %326 = vmatpush1.msra.mxu0 0.0
        %327 = vmatprep.subr.mxu0 0.0
        %328 = vmatpush1.msra.mxu0 0.0
        %329 = vmatprep.subr.mxu0 0.0
        %330 = vmatpush1.msra.mxu0 0.0
        %331 = vmatprep.subr.mxu0 0.0
        %332 = vmatpush1.msra.mxu0 0.0
        %333 = vmatprep.subr.mxu0 0.0
        %334 = vmatpush1.msra.mxu0 0.0
        %335 = vmatprep.subr.mxu0 0.0
        %336 = vmatpush1.msra.mxu0 0.0
        %337 = vmatprep.subr.mxu0 0.0
        %338 = vmatpush1.msra.mxu0 0.0
        %339 = vmatprep.subr.mxu0 0.0
        %340 = vmatpush1.msra.mxu0 0.0
        %341 = vmatprep.subr.mxu0 %v281
        %342 = vmatpush1.msra.mxu0 %v280
        %343 = vmatprep.subr.mxu0 %v279
        %344 = vmatpush1.msra.mxu0 %v278
        %345 = vmatprep.subr.mxu0 0.0
        %346 = vmatpush2.msra.mxu0 0.0
        %347 = vmatprep.subr.mxu0 0.0
        %348 = vmatpush2.msra.mxu0 0.0
        %349 = vmatprep.subr.mxu0 0.0
        %350 = vmatpush2.msra.mxu0 0.0
        %351 = vmatprep.subr.mxu0 0.0
        %352 = vmatpush2.msra.mxu0 0.0
        %353 = vmatprep.subr.mxu0 0.0
        %354 = vmatpush2.msra.mxu0 0.0
        %355 = vmatprep.subr.mxu0 0.0
        %356 = vmatpush2.msra.mxu0 0.0
        %357 = vmatprep.subr.mxu0 0.0
        %358 = vmatpush2.msra.mxu0 0.0
        %359 = vmatprep.subr.mxu0 0.0
        %360 = vmatpush2.msra.mxu0 0.0
        %361 = vmatprep.subr.mxu0 0.0
        %362 = vmatpush2.msra.mxu0 0.0
        %363 = vmatprep.subr.mxu0 0.0
        %364 = vmatpush2.msra.mxu0 0.0
        %365 = vmatprep.subr.mxu0 0.0
        %366 = vmatpush2.msra.mxu0 0.0
        %367 = vmatprep.subr.mxu0 0.0
        %368 = vmatpush2.msra.mxu0 0.0
        %369 = vmatprep.subr.mxu0 0.0
        %370 = vmatpush2.msra.mxu0 0.0
        %371 = vmatprep.subr.mxu0 0.0
        %372 = vmatpush2.msra.mxu0 0.0
        %373 = vmatprep.subr.mxu0 0.0
        %374 = vmatpush2.msra.mxu0 0.0
        %375 = vmatprep.subr.mxu0 0.0
        %376 = vmatpush2.msra.mxu0 0.0
        %377 = vmatprep.mubr.f32.mxu0 0.0
        %378 = vmatmul.mubr.f32.gmra.mxu0 %v305
        %v379 = vpop.f32.mrf.mxu0
        %v380 = vadd.f32 %v291, %v379
        %v381 = vpop.f32.mrf.mxu0
        %v382 = vadd.f32 %v291, %v381
        %383 = vmatprep.mubr.f32.mxu0 0.0
        %384 = vmatmul.mubr.f32.gmra.mxu0 %v308
        %v385 = vpop.f32.mrf.mxu0
        %v386 = vadd.f32 %v296, %v385
        %v387 = vpop.f32.mrf.mxu0
        %v388 = vadd.f32 %v296, %v387
        %389 = vmatprep.mubr.f32.mxu0 0.0
        %390 = vmatmul.mubr.f32.gmra.mxu0 %v311
        %v391 = vpop.f32.mrf.mxu0
        %v392 = vadd.f32 %v301, %v391
        %v393 = vpop.f32.mrf.mxu0
        %v394 = vadd.f32 %v301, %v393
        %395 = vdwg.mxu0
        %v396 = vpack.c.bf16 %v380, %v380
        %v397 = vpack.c.bf16 %v382, %v382
        %v400 = vcombine.low %v396, %v397
        %v402 = vunpack.c.l.s4 1966171168
        %v403 = vunpack.c.0.s8 %v402
        %v404 = vlaneseq
        %v405 = vshrl.u32 %v404, 7
        %v406 = vsub.s32 %v403, %v405
        %v407 = vrot.slane %v400, %v406
        %v409 = vunpack.c.l.s4 1966171168
        %v410 = vunpack.c.0.s8 %v409
        %v411 = vlaneseq
        %v412 = vshrl.u32 %v411, 7
        %v413 = vsub.s32 %v410, %v412
        %v414 = vrot.slane %v407, %v413
        %416 = vst [vmem:[%s250] sm:$0x3] %v414
        %v417 = vcombine.high %v407, %v407
        %v419 = vunpack.c.l.s4 1966171168
        %v420 = vunpack.c.0.s8 %v419
        %v421 = vlaneseq
        %v422 = vshrl.u32 %v421, 7
        %v423 = vsub.s32 %v420, %v422
        %v424 = vrot.slane %v417, %v423
        %426 = vst [vmem:[%s257] sm:$0x3] %v424
        %v427 = vpack.c.bf16 %v386, %v380
        %v428 = vpack.c.bf16 %v388, %v382
        %v429 = vpack.c.bf16 %v392, %v392
        %v430 = vpack.c.bf16 %v394, %v394
        %v435 = vunpack.c.l.b16 %v427
        %v436 = vunpack.c.l.b16 %v428
        %v437 = vunpack.c.h.b16 %v427
        %v438 = vunpack.c.h.b16 %v428
        %v439 = vunpack.c.l.b16 %v429
        %v440 = vunpack.c.l.b16 %v430
        %v441 = vpack.c.b16 %v436, %v435
        %v442 = vpack.c.b16 %v438, %v437
        %v443 = vpack.c.b16 %v440, %v439
        %vm444 = vcmask 1041408
        %vm445 = vcmask 1045508
        %vm446 = vmor %vm444, %vm445
        %v447 = vrot.slane %v441, 6
        %v448 = vrot.slane %v447, 4
        %v449 = vrot.slane %v442, 6
        %v450 = vsel %vm446, %v448, %v449
        %v451 = vrot.slane %v449, 4
        %v452 = vrot.slane %v443, 6
        %v453 = vsel %vm446, %v451, %v452
        %456 = vst [vmem:[%s264] sm:$0xff] %v450
        %457 = vst [vmem:[%s264 + $0x8] sm:$0xff] %v453
        %s458 = sand.u32 %s115, 1
        %s459 = scalar_lea.sflag [#allocation3], %s458
        %s460 = sand.u32 %s115, 1
        %s461 = smul.addr %s460, 2
        %s462 = scalar_lea.vmem [#allocation2], %s461
        %s463 = sand.u32 %s23, 1
        %s464 = scalar_lea.sflag [#allocation5], %s463
        %s465 = sand.u32 %s143, 1
        %s466 = smul.addr %s465, 2
        %s467 = scalar_lea.vmem [#allocation4], %s466
        %s468 = sand.u32 %s23, 1
        %s469 = scalar_lea.sflag [#allocation5], %s468
        %s470 = sand.u32 %s171, 1
        %s471 = smul.addr %s470, 16
        %s472 = scalar_lea.vmem [#allocation6], %s471
        // Predicated region
        $region33: #{tpu_custom_call.1} parent=31 // pred_check
          %p473 = pneg %p125
        $region34: #{tpu_custom_call.1} parent=31 // pred_check_branch
          %475 = sbr.rel (%p473) target = $region36
        $region35: #{tpu_custom_call.1} parent=31 // pred_region
          %s476 = smul.u32 2, %s28
          %s478 = ssub.s32 32, 32
          %479 = vsyncadd %s459, %s478
          %s480 = smul.addr %s27, 2
          %s481 = sadd.s32 %s476, %s480
          %s482 = smul.addr %s481, 16
          %s483 = scalar_lea.hbm %s3, %s482
          %s485 = sshll.u32 %s462, 4
          %s486 = int_to_ptr.vmem [resolvable:$true] %s485
          %488 = dma.vmem_to_hbm [thread:$0]  %s486, 32, %s483, %s459
        $region36: #{tpu_custom_call.1} parent=31 // pred_fallthru
          _
        // Predicated region
        $region37: #{tpu_custom_call.1} parent=31 // pred_check
          %p489 = pneg %p153
        $region38: #{tpu_custom_call.1} parent=31 // pred_check_branch
          %491 = sbr.rel (%p489) target = $region40
        $region39: #{tpu_custom_call.1} parent=31 // pred_region
          %s492 = smul.u32 2, %s28
          %s494 = ssub.s32 32, 32
          %495 = vsyncadd %s464, %s494
          %s496 = smul.addr %s27, 2
          %s497 = sadd.s32 %s492, %s496
          %s498 = smul.addr %s497, 16
          %s499 = scalar_lea.hbm %s4, %s498
          %s501 = sshll.u32 %s467, 4
          %s502 = int_to_ptr.vmem [resolvable:$true] %s501
          %504 = dma.vmem_to_hbm [thread:$0]  %s502, 32, %s499, %s464
        $region40: #{tpu_custom_call.1} parent=31 // pred_fallthru
          _
        // Predicated region
        $region41: #{tpu_custom_call.1} parent=31 // pred_check
          %p505 = pneg %p181
        $region42: #{tpu_custom_call.1} parent=31 // pred_check_branch
          %507 = sbr.rel (%p505) target = $region44
        $region43: #{tpu_custom_call.1} parent=31 // pred_region
          %s508 = smul.u32 2, %s28
          %s510 = ssub.s32 256, 256
          %511 = vsyncadd %s469, %s510
          %s512 = smul.addr %s27, 4
          %s513 = sadd.s32 %s508, %s512
          %s514 = smul.addr %s513, 64
          %s515 = scalar_lea.hbm %s5, %s514
          %s516 = sshll.u32 %s472, 4
          %s517 = int_to_ptr.vmem [resolvable:$true] %s516
          %522 = dma.vmem_to_hbm [thread:$0]  %s517, 256, %s515, %s469, 128, 128, 8
        $region44: #{tpu_custom_call.1} parent=31 // pred_fallthru
          _
      $region32: #{tpu_custom_call.1} parent=5 // pred_fallthru
        _
      %p523 = scmp.le.s32.totalorder 2, %s18
      // Predicated region
      $region45: #{tpu_custom_call.1} parent=5 // pred_check
        %p524 = pneg %p523
      $region46: #{tpu_custom_call.1} parent=5 // pred_check_branch
        %526 = sbr.rel (%p524) target = $region48
      $region47: #{tpu_custom_call.1} parent=5 // pred_region
        %s527 = ssub.s32 %s18, 2
        // Predicated region
        $region49: #{tpu_custom_call.1} parent=47 // pred_check
          %p528 = pneg %p131
        $region50: #{tpu_custom_call.1} parent=47 // pred_check_branch
          %530 = sbr.rel (%p528) target = $region52
        $region51: #{tpu_custom_call.1} parent=47 // pred_region
          %s531 = sand.u32 %s116, 1
          %s532 = scalar_lea.sflag [#allocation3], %s531
          %s533 = sand.u32 %s116, 1
          %s534 = smul.addr %s533, 2
          %s535 = scalar_lea.vmem [#allocation2], %s534
          %536 = dma.done %s532, 32
        $region52: #{tpu_custom_call.1} parent=47 // pred_fallthru
          _
        // Predicated region
        $region53: #{tpu_custom_call.1} parent=47 // pred_check
          %p537 = pneg %p159
        $region54: #{tpu_custom_call.1} parent=47 // pred_check_branch
          %539 = sbr.rel (%p537) target = $region56
        $region55: #{tpu_custom_call.1} parent=47 // pred_region
          %s540 = sand.u32 %s24, 1
          %s541 = scalar_lea.sflag [#allocation5], %s540
          %s542 = sand.u32 %s144, 1
          %s543 = smul.addr %s542, 2
          %s544 = scalar_lea.vmem [#allocation4], %s543
          %545 = dma.done %s541, 32
        $region56: #{tpu_custom_call.1} parent=47 // pred_fallthru
          _
        // Predicated region
        $region57: #{tpu_custom_call.1} parent=47 // pred_check
          %p546 = pneg %p187
        $region58: #{tpu_custom_call.1} parent=47 // pred_check_branch
          %548 = sbr.rel (%p546) target = $region60
        $region59: #{tpu_custom_call.1} parent=47 // pred_region
          %s549 = sand.u32 %s24, 1
          %s550 = scalar_lea.sflag [#allocation5], %s549
          %s551 = sand.u32 %s172, 1
          %s552 = smul.addr %s551, 16
          %s553 = scalar_lea.vmem [#allocation6], %s552
          %554 = dma.done %s550, 256
        $region60: #{tpu_custom_call.1} parent=47 // pred_fallthru
          _
      $region48: #{tpu_custom_call.1} parent=5 // pred_fallthru
        _
    $region6: #{tpu_custom_call.1} parent=1 // loop_footer
      %s22 = sadd.s32 1, %s18
    $region7: #{tpu_custom_call.1} parent=1 // loop_footer_branch
      %17 = sbr.rel target = $region3
    $region8: #{tpu_custom_call.1} parent=1 // loop_exit
      _
    %555 = vsyncpa [#allocation3], 1
    %s556 = scalar_lea.sflag [#allocation3], 1
    %557 = vsyncpa %s556, 1
    %558 = vsyncpa [#allocation5], 1
    %s559 = scalar_lea.sflag [#allocation5], 1
    %560 = vsyncpa %s559, 1

</llo_original>
